<compile_context>
chip_gen: v6e
topology: v6e:2x2x1
jax: 0.10.0
libtpu: 0.0.40
codegen_flags: <defaults>
</compile_context>

<pallas_src>
import functools

import jax
import jax.numpy as jnp
from jax.experimental import pallas as pl
from jax.experimental.pallas import tpu as pltpu


# ----------------------------------------------------------------------------
# Fused kernel: conv-as-matmul (per image) -> ONE bilinear-upsample matmul for the
# whole image block -> per-image channel argmax -> single int8 store.
#   p_ref     : (B, J, Hf*Wf)   bf16 patch block (J = Cin*kh*kw), b-major
#   w_ref     : (K_pad, J)      bf16 conv weights, classes on rows (padded to 8)
#   b_ref     : (K_pad, 1)      f32 conv bias (lane-broadcast)
#   interp_ref: (Hf*Wf, Ho*Wo)  bf16 kron(Wy, Wx)^T, align_corners=True bilinear
#   o_ref     : (B, Ho*Wo) i8   class index per pixel (lane-dense)
# ----------------------------------------------------------------------------
def _segment_fused_kernel(p_ref, w_ref, b_ref, interp_ref, o_ref, *,
                          images_per_block, num_classes, padded_classes):
    B, K, Kp = images_per_block, num_classes, padded_classes

    w = w_ref[...]                                             # (Kp, J) bf16
    bias = b_ref[...]                                          # (Kp, 1) f32

    # Conv for every image in the block: classes on sublanes, spatial on lanes,
    # contraction on the trailing dim.  Rows are packed b-major into one
    # (B*Kp, Hf*Wf) slab (concat in f32 keeps pieces tile-aligned; equivalent to the
    # "write into a VMEM scratch" formulation but the values stay in vregs).
    feats = []
    for b in range(B):
        f = jnp.dot(w, p_ref[b], preferred_element_type=jnp.float32)   # (Kp, S) f32
        feats.append(f + bias)
    feat_all = jnp.concatenate(feats, axis=0).astype(jnp.bfloat16)     # (B*Kp, S)

    # Bilinear upsample (align_corners=True) for ALL images/classes in the block as
    # ONE MXU matmul with a lane-dense (Ho*Wo) output.
    up = jnp.dot(feat_all, interp_ref[...],
                 preferred_element_type=jnp.float32)           # (B*Kp, Ho*Wo) f32

    # torch.argmax(dim=1, keepdim=True): unrolled compare/select over the K real class
    # rows of each image's aligned 8-sublane group (pure VPU work, first-max
    # tie-breaking like jnp/torch argmax).  Padded class rows are never read.
    rows = []
    for b in range(B):
        base = b * Kp
        best_val = up[base:base + 1, :]                        # (1, Ho*Wo)
        best_idx = jnp.zeros(best_val.shape, dtype=jnp.int32)
        for k in range(1, K):
            vk = up[base + k:base + k + 1, :]
            take = vk > best_val
            best_val = jnp.where(take, vk, best_val)
            best_idx = jnp.where(take, jnp.int32(k), best_idx)
        rows.append(best_idx)

    # Single wide unmasked store (good for v5e's single vst slot); int8 cuts the
    # output HBM writeback 4x vs int32.
    o_ref[...] = jnp.concatenate(rows, axis=0).astype(jnp.int8)


# ----------------------------------------------------------------------------
# Glue: interpolation matrices and end-to-end forward.
# ----------------------------------------------------------------------------
def bilinear_matrix_align_corners(out_size, in_size):
    """Dense (out_size, in_size) matrix equivalent to torch bilinear interpolation
    along one axis with align_corners=True."""
    if out_size == 1:
        return jnp.zeros((1, in_size), jnp.float32).at[0, 0].set(1.0)
    o = jnp.arange(out_size, dtype=jnp.float32)
    f = o * (in_size - 1) / (out_size - 1)
    i0 = jnp.clip(jnp.floor(f).astype(jnp.int32), 0, in_size - 1)
    i1 = jnp.minimum(i0 + 1, in_size - 1)
    w1 = f - i0.astype(jnp.float32)
    w0 = 1.0 - w1
    return (jax.nn.one_hot(i0, in_size, dtype=jnp.float32) * w0[:, None]
            + jax.nn.one_hot(i1, in_size, dtype=jnp.float32) * w1[:, None])


@functools.partial(jax.jit, static_argnames=("input_size", "block_images"))
def segment_model_forward(x_nchw, conv_w, conv_b, input_size=(16, 16), block_images=8):
    """x_nchw: (N, Cin, H, W) float32.  Returns (N, 1, *input_size) int32 class map."""
    N, Cin, H, W = x_nchw.shape
    num_classes, _, kh, kw = conv_w.shape
    Hf, Wf = H // kh, W // kw
    Ho, Wo = input_size
    S = Hf * Wf
    J = Cin * kh * kw
    K_pad = ((num_classes + 7) // 8) * 8            # pad classes to a sublane multiple
    B = max(1, min(N, block_images))                # images per grid step
    G = pl.cdiv(N, B)                               # grid length (>=2 for large N -> v7x megacore)
    Npad = G * B

    # Patch matrix for the stride-2 conv: (N, J, Hf*Wf), j ordered (c, dy, dx).
    # (Tiny here; see header TODO about fusing/eliminating this for large shapes.)
    p = x_nchw.reshape(N, Cin, Hf, kh, Wf, kw)
    p = jnp.transpose(p, (0, 1, 3, 5, 2, 4)).reshape(N, J, S)
    if Npad != N:
        p = jnp.pad(p, ((0, Npad - N), (0, 0), (0, 0)))
    p = p.astype(jnp.bfloat16)

    # Conv weights/bias, padded to K_pad class rows (padded rows ignored by the argmax).
    w_mat = (jnp.zeros((K_pad, J), jnp.float32)
             .at[:num_classes].set(conv_w.reshape(num_classes, J))
             .astype(jnp.bfloat16))
    b_col = jnp.zeros((K_pad, 1), jnp.float32).at[:num_classes, 0].set(conv_b)

    # Fused bilinear(align_corners=True): up = feat @ kron(Wy, Wx)^T (bf16 operands).
    wy = bilinear_matrix_align_corners(Ho, Hf)                 # (Ho, Hf)
    wx = bilinear_matrix_align_corners(Wo, Wf)                 # (Wo, Wf)
    interp_t = jnp.kron(wy, wx).T.astype(jnp.bfloat16)         # (Hf*Wf, Ho*Wo)

    kernel = functools.partial(_segment_fused_kernel,
                               images_per_block=B,
                               num_classes=num_classes,
                               padded_classes=K_pad)

    out_i8 = pl.pallas_call(
        kernel,
        out_shape=jax.ShapeDtypeStruct((Npad, Ho * Wo), jnp.int8),
        grid=(G,),
        in_specs=[
            pl.BlockSpec((B, J, S), lambda n: (n, 0, 0)),
            pl.BlockSpec((K_pad, J), lambda n: (0, 0)),
            pl.BlockSpec((K_pad, 1), lambda n: (0, 0)),
            pl.BlockSpec((S, Ho * Wo), lambda n: (0, 0)),
        ],
        out_specs=pl.BlockSpec((B, Ho * Wo), lambda n: (n, 0)),
        compiler_params=pltpu.CompilerParams(
            dimension_semantics=("parallel",),      # image-block axis -> both v7x TCs
            vmem_limit_bytes=32 * 1024 * 1024,
        ),
    )(p, w_mat, b_col, interp_t)

    # int8 class ids -> int32 (torch.argmax would give int64; int32 is TPU-native),
    # reshape (N, Ho*Wo) -> (N, 1, Ho, Wo): both free XLA ops.
    return out_i8[:N].astype(jnp.int32).reshape(N, 1, Ho, Wo)


if __name__ == "__main__":
    key = jax.random.PRNGKey(0)
    k_x, k_w, k_b = jax.random.split(key, 3)

    N, Cin, H, W = 2, 4, 16, 16
    num_classes = 6
    input_size = (16, 16)

    x = jax.random.normal(k_x, (N, Cin, H, W), dtype=jnp.float32)
    conv_w = jax.random.normal(k_w, (num_classes, Cin, 2, 2), dtype=jnp.float32) * 0.1
    conv_b = jax.random.normal(k_b, (num_classes,), dtype=jnp.float32) * 0.1

    out = segment_model_forward(x, conv_w, conv_b, input_size=input_size)
    out = jax.block_until_ready(out)
    assert out.shape == (N, 1, *input_size), out.shape
    assert out.dtype == jnp.int32

    # Pure-JAX f32 reference (separable formulation, independent of the kernel path):
    # conv -> bilinear(align_corners=True) -> argmax over classes.
    Hf, Wf = H // 2, W // 2
    xr = jnp.transpose(x, (0, 2, 3, 1))
    pr = xr.reshape(N, Hf, 2, Wf, 2, Cin).transpose(0, 1, 3, 2, 4, 5)
    pr = pr.reshape(N * Hf * Wf, 4 * Cin)
    wr = jnp.transpose(conv_w, (2, 3, 1, 0)).reshape(4 * Cin, num_classes)
    feat_r = (pr @ wr + conv_b[None, :]).reshape(N, Hf, Wf, num_classes)
    wy = bilinear_matrix_align_corners(input_size[0], Hf)
    wx = bilinear_matrix_align_corners(input_size[1], Wf)
    up_r = jnp.einsum("oh,nhwk->nowk", wy, feat_r)
    up_r = jnp.einsum("pw,nowk->nopk", wx, up_r)               # (N, Ho, Wo, K)
    ref_idx = jnp.argmax(up_r, axis=-1).astype(jnp.int32)      # (N, Ho, Wo)

    agree = out[:, 0] == ref_idx
    if not bool(jnp.all(agree)):
        # Tolerate index differences only where the reference top-2 logits are nearly
        # tied: the kernel uses bf16 operands (f32 accumulation), so its logits can
        # differ from the f32 reference by a few 1e-3 at these magnitudes.
        srt = jnp.sort(up_r, axis=-1)
        gap = srt[..., -1] - srt[..., -2]
        assert bool(jnp.all(jnp.logical_or(agree, gap < 5e-2))), \
            "Pallas output mismatch vs reference"

    print("KERNEL_OK")
</pallas_src>

<mosaic_0001>
module attributes {stable_mosaic.version = 11 : i64} {
  func.func @_segment_fused_kernel(%arg0: i32, %arg1: memref<2x16x64xbf16, #tpu.memory_space<vmem>>, %arg2: memref<8x16xbf16, #tpu.memory_space<vmem>>, %arg3: memref<8x1xf32, #tpu.memory_space<vmem>>, %arg4: memref<64x256xbf16, #tpu.memory_space<vmem>>, %arg5: memref<2x256xi8, #tpu.memory_space<vmem>>) attributes {dimension_semantics = [#tpu.dimension_semantics<parallel>], iteration_bounds = array<i64: 1>, scalar_prefetch = 0 : i64, scratch_operands = 0 : i64, tpu.core_type = #tpu.core_type<tc>, window_params = [{transform_indices = @transform_0, window_bounds = array<i64: 2, 16, 64>}, {pipeline_mode = #tpu.pipeline_mode<synchronous>, transform_indices = @transform_1, window_bounds = array<i64: 8, 16>}, {pipeline_mode = #tpu.pipeline_mode<synchronous>, transform_indices = @transform_2, window_bounds = array<i64: 8, 1>}, {pipeline_mode = #tpu.pipeline_mode<synchronous>, transform_indices = @transform_3, window_bounds = array<i64: 64, 256>}, {transform_indices = @transform_4, window_bounds = array<i64: 2, 256>}]} {
    %c0 = arith.constant 0 : index
    %c0_0 = arith.constant 0 : index
    %0 = vector.load %arg2[%c0, %c0_0] : memref<8x16xbf16, #tpu.memory_space<vmem>>, vector<8x16xbf16>
    %c0_1 = arith.constant 0 : index
    %c0_2 = arith.constant 0 : index
    %1 = vector.load %arg3[%c0_1, %c0_2] : memref<8x1xf32, #tpu.memory_space<vmem>>, vector<8x1xf32>
    %c0_3 = arith.constant 0 : index
    %c0_4 = arith.constant 0 : index
    %c0_5 = arith.constant 0 : index
    %2 = vector.load %arg1[%c0_3, %c0_4, %c0_5] : memref<2x16x64xbf16, #tpu.memory_space<vmem>>, vector<1x16x64xbf16>
    %3 = vector.shape_cast %2 : vector<1x16x64xbf16> to vector<16x64xbf16>
    %cst = arith.constant dense<0.000000e+00> : vector<8x64xf32>
    %4 = tpu.matmul %0, %3, %cst {dimension_numbers = #tpu.dot_dimension_numbers<[1], [0], [0], [1], [0, 0, 1, 1], [], []>} : vector<8x16xbf16>, vector<16x64xbf16>, vector<8x64xf32> -> vector<8x64xf32>
    %5 = vector.broadcast %1 : vector<8x1xf32> to vector<8x64xf32>
    %6 = arith.addf %4, %5 : vector<8x64xf32>
    %c1 = arith.constant 1 : index
    %c0_6 = arith.constant 0 : index
    %c0_7 = arith.constant 0 : index
    %7 = vector.load %arg1[%c1, %c0_6, %c0_7] : memref<2x16x64xbf16, #tpu.memory_space<vmem>>, vector<1x16x64xbf16>
    %8 = vector.shape_cast %7 : vector<1x16x64xbf16> to vector<16x64xbf16>
    %cst_8 = arith.constant dense<0.000000e+00> : vector<8x64xf32>
    %9 = tpu.matmul %0, %8, %cst_8 {dimension_numbers = #tpu.dot_dimension_numbers<[1], [0], [0], [1], [0, 0, 1, 1], [], []>} : vector<8x16xbf16>, vector<16x64xbf16>, vector<8x64xf32> -> vector<8x64xf32>
    %10 = vector.broadcast %1 : vector<8x1xf32> to vector<8x64xf32>
    %11 = arith.addf %9, %10 : vector<8x64xf32>
    %12 = tpu.concatenate %6, %11 in 0 : vector<8x64xf32>, vector<8x64xf32> -> vector<16x64xf32>
    %13 = arith.truncf %12 : vector<16x64xf32> to vector<16x64xbf16>
    %c0_9 = arith.constant 0 : index
    %c0_10 = arith.constant 0 : index
    %14 = vector.load %arg4[%c0_9, %c0_10] : memref<64x256xbf16, #tpu.memory_space<vmem>>, vector<64x256xbf16>
    %cst_11 = arith.constant dense<0.000000e+00> : vector<16x256xf32>
    %15 = tpu.matmul %13, %14, %cst_11 {dimension_numbers = #tpu.dot_dimension_numbers<[1], [0], [0], [1], [0, 0, 1, 1], [], []>} : vector<16x64xbf16>, vector<64x256xbf16>, vector<16x256xf32> -> vector<16x256xf32>
    %16 = vector.extract_strided_slice %15 {offsets = [0, 0], sizes = [1, 256], strides = [1, 1]} : vector<16x256xf32> to vector<1x256xf32>
    %c0_i32 = arith.constant 0 : i32
    %17 = vector.broadcast %c0_i32 : i32 to vector<1x256xi32>
    %18 = vector.extract_strided_slice %15 {offsets = [1, 0], sizes = [1, 256], strides = [1, 1]} : vector<16x256xf32> to vector<1x256xf32>
    %19 = arith.cmpf ogt, %18, %16 : vector<1x256xf32>
    %20 = arith.select %19, %18, %16 : vector<1x256xi1>, vector<1x256xf32>
    %c1_i32 = arith.constant 1 : i32
    %21 = vector.broadcast %c1_i32 : i32 to vector<1x256xi32>
    %22 = arith.select %19, %21, %17 : vector<1x256xi1>, vector<1x256xi32>
    %23 = vector.extract_strided_slice %15 {offsets = [2, 0], sizes = [1, 256], strides = [1, 1]} : vector<16x256xf32> to vector<1x256xf32>
    %24 = arith.cmpf ogt, %23, %20 : vector<1x256xf32>
    %25 = arith.select %24, %23, %20 : vector<1x256xi1>, vector<1x256xf32>
    %c2_i32 = arith.constant 2 : i32
    %26 = vector.broadcast %c2_i32 : i32 to vector<1x256xi32>
    %27 = arith.select %24, %26, %22 : vector<1x256xi1>, vector<1x256xi32>
    %28 = vector.extract_strided_slice %15 {offsets = [3, 0], sizes = [1, 256], strides = [1, 1]} : vector<16x256xf32> to vector<1x256xf32>
    %29 = arith.cmpf ogt, %28, %25 : vector<1x256xf32>
    %30 = arith.select %29, %28, %25 : vector<1x256xi1>, vector<1x256xf32>
    %c3_i32 = arith.constant 3 : i32
    %31 = vector.broadcast %c3_i32 : i32 to vector<1x256xi32>
    %32 = arith.select %29, %31, %27 : vector<1x256xi1>, vector<1x256xi32>
    %33 = vector.extract_strided_slice %15 {offsets = [4, 0], sizes = [1, 256], strides = [1, 1]} : vector<16x256xf32> to vector<1x256xf32>
    %34 = arith.cmpf ogt, %33, %30 : vector<1x256xf32>
    %35 = arith.select %34, %33, %30 : vector<1x256xi1>, vector<1x256xf32>
    %c4_i32 = arith.constant 4 : i32
    %36 = vector.broadcast %c4_i32 : i32 to vector<1x256xi32>
    %37 = arith.select %34, %36, %32 : vector<1x256xi1>, vector<1x256xi32>
    %38 = vector.extract_strided_slice %15 {offsets = [5, 0], sizes = [1, 256], strides = [1, 1]} : vector<16x256xf32> to vector<1x256xf32>
    %39 = arith.cmpf ogt, %38, %35 : vector<1x256xf32>
    %c5_i32 = arith.constant 5 : i32
    %40 = vector.broadcast %c5_i32 : i32 to vector<1x256xi32>
    %41 = arith.select %39, %40, %37 : vector<1x256xi1>, vector<1x256xi32>
    %42 = vector.extract_strided_slice %15 {offsets = [8, 0], sizes = [1, 256], strides = [1, 1]} : vector<16x256xf32> to vector<1x256xf32>
    %c0_i32_12 = arith.constant 0 : i32
    %43 = vector.broadcast %c0_i32_12 : i32 to vector<1x256xi32>
    %44 = vector.extract_strided_slice %15 {offsets = [9, 0], sizes = [1, 256], strides = [1, 1]} : vector<16x256xf32> to vector<1x256xf32>
    %45 = arith.cmpf ogt, %44, %42 : vector<1x256xf32>
    %46 = arith.select %45, %44, %42 : vector<1x256xi1>, vector<1x256xf32>
    %c1_i32_13 = arith.constant 1 : i32
    %47 = vector.broadcast %c1_i32_13 : i32 to vector<1x256xi32>
    %48 = arith.select %45, %47, %43 : vector<1x256xi1>, vector<1x256xi32>
    %49 = vector.extract_strided_slice %15 {offsets = [10, 0], sizes = [1, 256], strides = [1, 1]} : vector<16x256xf32> to vector<1x256xf32>
    %50 = arith.cmpf ogt, %49, %46 : vector<1x256xf32>
    %51 = arith.select %50, %49, %46 : vector<1x256xi1>, vector<1x256xf32>
    %c2_i32_14 = arith.constant 2 : i32
    %52 = vector.broadcast %c2_i32_14 : i32 to vector<1x256xi32>
    %53 = arith.select %50, %52, %48 : vector<1x256xi1>, vector<1x256xi32>
    %54 = vector.extract_strided_slice %15 {offsets = [11, 0], sizes = [1, 256], strides = [1, 1]} : vector<16x256xf32> to vector<1x256xf32>
    %55 = arith.cmpf ogt, %54, %51 : vector<1x256xf32>
    %56 = arith.select %55, %54, %51 : vector<1x256xi1>, vector<1x256xf32>
    %c3_i32_15 = arith.constant 3 : i32
    %57 = vector.broadcast %c3_i32_15 : i32 to vector<1x256xi32>
    %58 = arith.select %55, %57, %53 : vector<1x256xi1>, vector<1x256xi32>
    %59 = vector.extract_strided_slice %15 {offsets = [12, 0], sizes = [1, 256], strides = [1, 1]} : vector<16x256xf32> to vector<1x256xf32>
    %60 = arith.cmpf ogt, %59, %56 : vector<1x256xf32>
    %61 = arith.select %60, %59, %56 : vector<1x256xi1>, vector<1x256xf32>
    %c4_i32_16 = arith.constant 4 : i32
    %62 = vector.broadcast %c4_i32_16 : i32 to vector<1x256xi32>
    %63 = arith.select %60, %62, %58 : vector<1x256xi1>, vector<1x256xi32>
    %64 = vector.extract_strided_slice %15 {offsets = [13, 0], sizes = [1, 256], strides = [1, 1]} : vector<16x256xf32> to vector<1x256xf32>
    %65 = arith.cmpf ogt, %64, %61 : vector<1x256xf32>
    %c5_i32_17 = arith.constant 5 : i32
    %66 = vector.broadcast %c5_i32_17 : i32 to vector<1x256xi32>
    %67 = arith.select %65, %66, %63 : vector<1x256xi1>, vector<1x256xi32>
    %68 = tpu.concatenate %41, %67 in 0 : vector<1x256xi32>, vector<1x256xi32> -> vector<2x256xi32>
    %69 = arith.trunci %68 : vector<2x256xi32> to vector<2x256xi8>
    %c0_18 = arith.constant 0 : index
    %c0_19 = arith.constant 0 : index
    %70 = vector.load %arg5[%c0_18, %c0_19] : memref<2x256xi8, #tpu.memory_space<vmem>>, vector<2x256xi8>
    tpu.vector_store %arg5[%c0_18, %c0_19], %69 {strides = array<i32>} : memref<2x256xi8, #tpu.memory_space<vmem>>, vector<2x256xi8>,
    return
  }
  func.func @transform_0(%arg0: i32) -> (i32, i32, i32) {
    %c0_i32 = arith.constant 0 : i32
    %c0_i32_0 = arith.constant 0 : i32
    %c0_i32_1 = arith.constant 0 : i32
    return %arg0, %c0_i32, %c0_i32_0 : i32, i32, i32
  }
  func.func @transform_1(%arg0: i32) -> (i32, i32) {
    %c0_i32 = arith.constant 0 : i32
    %c0_i32_0 = arith.constant 0 : i32
    %c0_i32_1 = arith.constant 0 : i32
    return %c0_i32, %c0_i32_0 : i32, i32
  }
  func.func @transform_2(%arg0: i32) -> (i32, i32) {
    %c0_i32 = arith.constant 0 : i32
    %c0_i32_0 = arith.constant 0 : i32
    %c0_i32_1 = arith.constant 0 : i32
    return %c0_i32, %c0_i32_0 : i32, i32
  }
  func.func @transform_3(%arg0: i32) -> (i32, i32) {
    %c0_i32 = arith.constant 0 : i32
    %c0_i32_0 = arith.constant 0 : i32
    %c0_i32_1 = arith.constant 0 : i32
    return %c0_i32, %c0_i32_0 : i32, i32
  }
  func.func @transform_4(%arg0: i32) -> (i32, i32) {
    %c0_i32 = arith.constant 0 : i32
    %c0_i32_0 = arith.constant 0 : i32
    return %arg0, %c0_i32 : i32, i32
  }
}

</mosaic_0001>

<llo_original>
// kernel: segment_model_forward.1
$region0: #{segment_model_forward.1}
  #allocation0 [shape = 'u32[]', space=smem, size = 0x4, offset = 0x4, fixed_abs, tag = 'smem constant byte address 0x4 - core index']
  #allocation1 [shape = 'u32[144,128]{1,0:T(1,128)}', space=vmem, size = 0x12000, scoped, tag = 'internal scratch']
  %s0 = inlined_call_operand.vmem [shape: bf16[2,16,64], index: 0, kind: input, shape index: {}]
  %s1 = inlined_call_operand.vmem [shape: bf16[8,16], index: 1, kind: input, shape index: {}]
  %s2 = inlined_call_operand.vmem [shape: f32[8,1], index: 2, kind: input, shape index: {}]
  %s3 = inlined_call_operand.vmem [shape: bf16[64,256], index: 3, kind: input, shape index: {}]
  %s4 = inlined_call_operand.vmem [shape: s8[2,256], index: 4, kind: output, shape index: {}]
  %s5 = sld [smem:[#allocation0]]
  $region26: #{segment_model_forward.1} parent=0
    _
  %s7 = ssub.s32 1, %s5
  %s8 = scalar_select 0, %s7, %s5
  // Predicated region
  $region2: #{segment_model_forward.1} parent=0 // pred_check
    _
  $region3: #{segment_model_forward.1} parent=0 // pred_check_branch
    %10 = sbr.rel (0) target = $region5
  $region4: #{segment_model_forward.1} parent=0 // pred_region
    _
  $region5: #{segment_model_forward.1} parent=0 // pred_fallthru
    _
  // Predicated region
  $region6: #{segment_model_forward.1} parent=0 // pred_check
    _
  $region7: #{segment_model_forward.1} parent=0 // pred_check_branch
    %12 = sbr.rel (0) target = $region9
  $region8: #{segment_model_forward.1} parent=0 // pred_region
    _
  $region9: #{segment_model_forward.1} parent=0 // pred_fallthru
    _
  // Predicated region
  $region10: #{segment_model_forward.1} parent=0 // pred_check
    _
  $region11: #{segment_model_forward.1} parent=0 // pred_check_branch
    %14 = sbr.rel (0) target = $region13
  $region12: #{segment_model_forward.1} parent=0 // pred_region
    _
  $region13: #{segment_model_forward.1} parent=0 // pred_fallthru
    _
  // Predicated region
  $region14: #{segment_model_forward.1} parent=0 // pred_check
    _
  $region15: #{segment_model_forward.1} parent=0 // pred_check_branch
    %16 = sbr.rel (0) target = $region17
  $region16: #{segment_model_forward.1} parent=0 // pred_region
    _
  $region17: #{segment_model_forward.1} parent=0 // pred_fallthru
    _
  %v18 = vld [vmem:[%s1] sm:$0xf]
  %v19 = vld [vmem:[%s2] sm:$0xff]
  %v20 = vld [vmem:[%s0] sm:$0xf]
  %v21 = vld [vmem:[%s0 + $0x4] sm:$0xf]
  %23 = vset.pattern.permute.xlu0 0
  %24 = vperm.xlu0 %23, %v19
  %v25 = vpop.permute.xlu0 %24
  %v29 = vunpack.c.l.b16 %v20
  %v30 = vunpack.c.l.b16 %v21
  %v31 = vpack.c.b16 %v30, %v29
  %vm33 = vcmask 130048
  %v35 = vsel %vm33, %v18, 0
  %37 = vmatprep.subr.bf16.mxu0 0
  %38 = vmatpush1.bf16.msra.mxu0 0
  %39 = vmatprep.subr.bf16.mxu0 0
  %40 = vmatpush1.bf16.msra.mxu0 0
  %41 = vmatprep.subr.bf16.mxu0 0
  %42 = vmatpush1.bf16.msra.mxu0 0
  %43 = vmatprep.subr.bf16.mxu0 0
  %44 = vmatpush1.bf16.msra.mxu0 0
  %45 = vmatprep.subr.bf16.mxu0 0
  %46 = vmatpush1.bf16.msra.mxu0 0
  %47 = vmatprep.subr.bf16.mxu0 0
  %48 = vmatpush1.bf16.msra.mxu0 0
  %49 = vmatprep.subr.bf16.mxu0 0
  %50 = vmatpush1.bf16.msra.mxu0 0
  %51 = vmatprep.subr.bf16.mxu0 0
  %52 = vmatpush1.bf16.msra.mxu0 %v31
  %53 = vmatprep.subr.bf16.mxu0 0
  %54 = vmatpush2.bf16.msra.mxu0 0
  %55 = vmatprep.subr.bf16.mxu0 0
  %56 = vmatpush2.bf16.msra.mxu0 0
  %57 = vmatprep.subr.bf16.mxu0 0
  %58 = vmatpush2.bf16.msra.mxu0 0
  %59 = vmatprep.subr.bf16.mxu0 0
  %60 = vmatpush2.bf16.msra.mxu0 0
  %61 = vmatprep.subr.bf16.mxu0 0
  %62 = vmatpush2.bf16.msra.mxu0 0
  %63 = vmatprep.subr.bf16.mxu0 0
  %64 = vmatpush2.bf16.msra.mxu0 0
  %65 = vmatprep.subr.bf16.mxu0 0
  %66 = vmatpush2.bf16.msra.mxu0 0
  %67 = vmatprep.subr.bf16.mxu0 0
  %68 = vmatpush2.bf16.msra.mxu0 0
  %69 = vmatprep.mubr.bf16.mxu0 0
  %70 = vmatmul.mubr.bf16.gmra.mxu0 %v35
  %v71 = vpop.f32.mrf.mxu0
  %v72 = vadd.f32 %v25, %v71
  %v73 = vpop.f32.mrf.mxu0
  %v74 = vpop.f32.mrf.mxu0
  %v75 = vpop.f32.mrf.mxu0
  %76 = vdwg.mxu0
  %s77 = scalar_lea.vmem %s0, 8
  %v78 = vld [vmem:[%s77] sm:$0xf]
  %v79 = vld [vmem:[%s77 + $0x4] sm:$0xf]
  %v82 = vunpack.c.l.b16 %v78
  %v83 = vunpack.c.l.b16 %v79
  %v84 = vpack.c.b16 %v83, %v82
  %86 = vmatprep.subr.bf16.mxu0 0
  %87 = vmatpush1.bf16.msra.mxu0 0
  %88 = vmatprep.subr.bf16.mxu0 0
  %89 = vmatpush1.bf16.msra.mxu0 0
  %90 = vmatprep.subr.bf16.mxu0 0
  %91 = vmatpush1.bf16.msra.mxu0 0
  %92 = vmatprep.subr.bf16.mxu0 0
  %93 = vmatpush1.bf16.msra.mxu0 0
  %94 = vmatprep.subr.bf16.mxu0 0
  %95 = vmatpush1.bf16.msra.mxu0 0
  %96 = vmatprep.subr.bf16.mxu0 0
  %97 = vmatpush1.bf16.msra.mxu0 0
  %98 = vmatprep.subr.bf16.mxu0 0
  %99 = vmatpush1.bf16.msra.mxu0 0
  %100 = vmatprep.subr.bf16.mxu0 0
  %101 = vmatpush1.bf16.msra.mxu0 %v84
  %102 = vmatprep.subr.bf16.mxu0 0
  %103 = vmatpush2.bf16.msra.mxu0 0
  %104 = vmatprep.subr.bf16.mxu0 0
  %105 = vmatpush2.bf16.msra.mxu0 0
  %106 = vmatprep.subr.bf16.mxu0 0
  %107 = vmatpush2.bf16.msra.mxu0 0
  %108 = vmatprep.subr.bf16.mxu0 0
  %109 = vmatpush2.bf16.msra.mxu0 0
  %110 = vmatprep.subr.bf16.mxu0 0
  %111 = vmatpush2.bf16.msra.mxu0 0
  %112 = vmatprep.subr.bf16.mxu0 0
  %113 = vmatpush2.bf16.msra.mxu0 0
  %114 = vmatprep.subr.bf16.mxu0 0
  %115 = vmatpush2.bf16.msra.mxu0 0
  %116 = vmatprep.subr.bf16.mxu0 0
  %117 = vmatpush2.bf16.msra.mxu0 0
  %118 = vmatprep.mubr.bf16.mxu0 0
  %119 = vmatmul.mubr.bf16.gmra.mxu0 %v35
  %v120 = vpop.f32.mrf.mxu0
  %v121 = vadd.f32 %v25, %v120
  %v122 = vpop.f32.mrf.mxu0
  %v123 = vpop.f32.mrf.mxu0
  %v124 = vpop.f32.mrf.mxu0
  %125 = vdwg.mxu0
  %v126 = vpack.c.bf16 %v121, %v72
  %v127 = vld [vmem:[%s3] sm:$0xff]
  %v128 = vld [vmem:[%s3 + $0x8] sm:$0xff]
  %v129 = vld [vmem:[%s3 + $0x10] sm:$0xff]
  %v130 = vld [vmem:[%s3 + $0x18] sm:$0xff]
  %v131 = vld [vmem:[%s3 + $0x20] sm:$0xff]
  %v132 = vld [vmem:[%s3 + $0x28] sm:$0xff]
  %v133 = vld [vmem:[%s3 + $0x30] sm:$0xff]
  %v134 = vld [vmem:[%s3 + $0x38] sm:$0xff]
  %v143 = vunpack.c.l.b16 %v127
  %v144 = vunpack.c.h.b16 %v127
  %v145 = vunpack.c.l.b16 %v128
  %v146 = vunpack.c.h.b16 %v128
  %v147 = vunpack.c.l.b16 %v129
  %v148 = vunpack.c.h.b16 %v129
  %v149 = vunpack.c.l.b16 %v130
  %v150 = vunpack.c.h.b16 %v130
  %v151 = vunpack.c.l.b16 %v131
  %v152 = vunpack.c.h.b16 %v131
  %v153 = vunpack.c.l.b16 %v132
  %v154 = vunpack.c.h.b16 %v132
  %v155 = vunpack.c.l.b16 %v133
  %v156 = vunpack.c.h.b16 %v133
  %v157 = vunpack.c.l.b16 %v134
  %v158 = vunpack.c.h.b16 %v134
  %v159 = vpack.c.b16 %v145, %v143
  %v160 = vpack.c.b16 %v146, %v144
  %v161 = vpack.c.b16 %v149, %v147
  %v162 = vpack.c.b16 %v150, %v148
  %v163 = vpack.c.b16 %v153, %v151
  %v164 = vpack.c.b16 %v154, %v152
  %v165 = vpack.c.b16 %v157, %v155
  %v166 = vpack.c.b16 %v158, %v156
  %vm175 = vcmask 523264
  %v177 = vsel %vm175, %v126, 0
  %179 = vmatprep.subr.bf16.mxu0 0
  %180 = vmatpush1.bf16.msra.mxu0 0
  %181 = vmatprep.subr.bf16.mxu0 0
  %182 = vmatpush1.bf16.msra.mxu0 0
  %183 = vmatprep.subr.bf16.mxu0 0
  %184 = vmatpush1.bf16.msra.mxu0 0
  %185 = vmatprep.subr.bf16.mxu0 0
  %186 = vmatpush1.bf16.msra.mxu0 0
  %187 = vmatprep.subr.bf16.mxu0 %v166
  %188 = vmatpush1.bf16.msra.mxu0 %v165
  %189 = vmatprep.subr.bf16.mxu0 %v164
  %190 = vmatpush1.bf16.msra.mxu0 %v163
  %191 = vmatprep.subr.bf16.mxu0 %v162
  %192 = vmatpush1.bf16.msra.mxu0 %v161
  %193 = vmatprep.subr.bf16.mxu0 %v160
  %194 = vmatpush1.bf16.msra.mxu0 %v159
  %195 = vmatprep.subr.bf16.mxu0 0
  %196 = vmatpush2.bf16.msra.mxu0 0
  %197 = vmatprep.subr.bf16.mxu0 0
  %198 = vmatpush2.bf16.msra.mxu0 0
  %199 = vmatprep.subr.bf16.mxu0 0
  %200 = vmatpush2.bf16.msra.mxu0 0
  %201 = vmatprep.subr.bf16.mxu0 0
  %202 = vmatpush2.bf16.msra.mxu0 0
  %203 = vmatprep.subr.bf16.mxu0 0
  %204 = vmatpush2.bf16.msra.mxu0 0
  %205 = vmatprep.subr.bf16.mxu0 0
  %206 = vmatpush2.bf16.msra.mxu0 0
  %207 = vmatprep.subr.bf16.mxu0 0
  %208 = vmatpush2.bf16.msra.mxu0 0
  %209 = vmatprep.subr.bf16.mxu0 0
  %210 = vmatpush2.bf16.msra.mxu0 0
  %211 = vmatprep.mubr.bf16.mxu0 0
  %212 = vmatmul.mubr.bf16.gmra.mxu0 %v177
  %v213 = vpop.f32.mrf.mxu0
  %v214 = vadd.f32 0.0, %v213
  %v215 = vpop.f32.mrf.mxu0
  %v216 = vadd.f32 0.0, %v215
  %v217 = vpop.f32.mrf.mxu0
  %v218 = vadd.f32 0.0, %v217
  %v219 = vpop.f32.mrf.mxu0
  %v220 = vadd.f32 0.0, %v219
  %221 = vdwg.mxu0
  %v224 = vrot.slane %v214, 7
  %v225 = vrot.slane %v216, 7
  %vm228 = vcmp.gt.f32.partialorder %v214, %v224
  %vm229 = vcmp.gt.f32.partialorder %v216, %v225
  %v230 = vsel %vm228, %v214, %v224
  %v231 = vsel %vm229, %v216, %v225
  %v232 = vsel %vm228, 1, 0
  %v233 = vsel %vm229, 1, 0
  %v236 = vrot.slane %v230, 7
  %v237 = vrot.slane %v231, 7
  %vm240 = vcmp.gt.f32.partialorder %v214, %v236
  %vm241 = vcmp.gt.f32.partialorder %v216, %v237
  %v242 = vsel %vm240, %v214, %v236
  %v243 = vsel %vm241, %v216, %v237
  %v244 = vrot.slane %v232, 7
  %v245 = vrot.slane %v233, 7
  %v246 = vsel %vm240, 2, %v244
  %v247 = vsel %vm241, 2, %v245
  %v250 = vrot.slane %v242, 7
  %v251 = vrot.slane %v243, 7
  %vm254 = vcmp.gt.f32.partialorder %v214, %v250
  %vm255 = vcmp.gt.f32.partialorder %v216, %v251
  %v256 = vsel %vm254, %v214, %v250
  %v257 = vsel %vm255, %v216, %v251
  %v258 = vrot.slane %v246, 7
  %v259 = vrot.slane %v247, 7
  %v260 = vsel %vm254, 3, %v258
  %v261 = vsel %vm255, 3, %v259
  %v264 = vrot.slane %v256, 7
  %v265 = vrot.slane %v257, 7
  %vm268 = vcmp.gt.f32.partialorder %v214, %v264
  %vm269 = vcmp.gt.f32.partialorder %v216, %v265
  %v270 = vsel %vm268, %v214, %v264
  %v271 = vsel %vm269, %v216, %v265
  %v272 = vrot.slane %v260, 7
  %v273 = vrot.slane %v261, 7
  %v274 = vsel %vm268, 4, %v272
  %v275 = vsel %vm269, 4, %v273
  %v278 = vrot.slane %v270, 7
  %v279 = vrot.slane %v271, 7
  %vm282 = vcmp.gt.f32.partialorder %v214, %v278
  %vm283 = vcmp.gt.f32.partialorder %v216, %v279
  %v284 = vrot.slane %v274, 7
  %v285 = vrot.slane %v275, 7
  %v286 = vsel %vm282, 5, %v284
  %v287 = vsel %vm283, 5, %v285
  %v290 = vrot.slane %v218, 7
  %v291 = vrot.slane %v220, 7
  %vm294 = vcmp.gt.f32.partialorder %v218, %v290
  %vm295 = vcmp.gt.f32.partialorder %v220, %v291
  %v296 = vsel %vm294, %v218, %v290
  %v297 = vsel %vm295, %v220, %v291
  %v298 = vsel %vm294, 1, 0
  %v299 = vsel %vm295, 1, 0
  %v302 = vrot.slane %v296, 7
  %v303 = vrot.slane %v297, 7
  %vm306 = vcmp.gt.f32.partialorder %v218, %v302
  %vm307 = vcmp.gt.f32.partialorder %v220, %v303
  %v308 = vsel %vm306, %v218, %v302
  %v309 = vsel %vm307, %v220, %v303
  %v310 = vrot.slane %v298, 7
  %v311 = vrot.slane %v299, 7
  %v312 = vsel %vm306, 2, %v310
  %v313 = vsel %vm307, 2, %v311
  %v316 = vrot.slane %v308, 7
  %v317 = vrot.slane %v309, 7
  %vm320 = vcmp.gt.f32.partialorder %v218, %v316
  %vm321 = vcmp.gt.f32.partialorder %v220, %v317
  %v322 = vsel %vm320, %v218, %v316
  %v323 = vsel %vm321, %v220, %v317
  %v324 = vrot.slane %v312, 7
  %v325 = vrot.slane %v313, 7
  %v326 = vsel %vm320, 3, %v324
  %v327 = vsel %vm321, 3, %v325
  %v330 = vrot.slane %v322, 7
  %v331 = vrot.slane %v323, 7
  %vm334 = vcmp.gt.f32.partialorder %v218, %v330
  %vm335 = vcmp.gt.f32.partialorder %v220, %v331
  %v336 = vsel %vm334, %v218, %v330
  %v337 = vsel %vm335, %v220, %v331
  %v338 = vrot.slane %v326, 7
  %v339 = vrot.slane %v327, 7
  %v340 = vsel %vm334, 4, %v338
  %v341 = vsel %vm335, 4, %v339
  %v344 = vrot.slane %v336, 7
  %v345 = vrot.slane %v337, 7
  %vm348 = vcmp.gt.f32.partialorder %v218, %v344
  %vm349 = vcmp.gt.f32.partialorder %v220, %v345
  %v350 = vrot.slane %v340, 7
  %v351 = vrot.slane %v341, 7
  %v352 = vsel %vm348, 5, %v350
  %v353 = vsel %vm349, 5, %v351
  %v354 = vrot.slane %v286, 5
  %v355 = vrot.slane %v287, 5
  %v356 = vrot.slane %v352, 4
  %v357 = vrot.slane %v353, 4
  %vm358 = vcmask 1040384
  %v359 = vsel %vm358, %v354, %v356
  %v360 = vsel %vm358, %v355, %v357
  %v361 = vpack.c.b16 %v359, %v359
  %v362 = vpack.c.b8 %v361, %v361
  %v363 = vpack.c.b16 %v360, %v360
  %v364 = vpack.c.b8 %v363, %v363
  %v365 = vcombine.low %v362, %v364
  %v367 = vunpack.c.l.s4 1966171168
  %v368 = vunpack.c.0.s8 %v367
  %v369 = vlaneseq
  %v370 = vshrl.u32 %v369, 7
  %v371 = vsub.s32 %v368, %v370
  %v372 = vrot.slane %v365, %v371
  %v374 = vunpack.c.l.s4 1966171168
  %v375 = vunpack.c.0.s8 %v374
  %v376 = vlaneseq
  %v377 = vshrl.u32 %v376, 7
  %v378 = vsub.s32 %v375, %v377
  %v379 = vrot.slane %v372, %v378
  %vm380 = vcmask 1040384
  %vm381 = vsmask.f32 256
  %vm382 = vmand %vm380, %vm381
  %vm383 = vcmask 1041409
  %vm384 = vsmask.f32 1280
  %vm385 = vmand %vm383, %vm384
  %vm386 = vmor %vm385, %vm382
  %v387 = vld [vmem:[%s4] sm:$0x3]
  %v388 = vsel %vm386, %v379, %v387
  %389 = vst [vmem:[%s4] sm:$0x3] %v388
  // Predicated region
  $region18: #{segment_model_forward.1} parent=0 // pred_check
    _
  $region19: #{segment_model_forward.1} parent=0 // pred_check_branch
    %391 = sbr.rel (0) target = $region21
  $region20: #{segment_model_forward.1} parent=0 // pred_region
    _
  $region21: #{segment_model_forward.1} parent=0 // pred_fallthru
    _
  // Predicated region
  $region22: #{segment_model_forward.1} parent=0 // pred_check
    _
  $region23: #{segment_model_forward.1} parent=0 // pred_check_branch
    %393 = sbr.rel (0) target = $region25
  $region24: #{segment_model_forward.1} parent=0 // pred_region
    _
  $region25: #{segment_model_forward.1} parent=0 // pred_fallthru
    _

</llo_original>
